<compile_context>
chip_gen: v7x
topology: tpu7x:2x2x1
jax: 0.10.0
libtpu: 0.0.40
codegen_flags: <defaults>
</compile_context>

<pallas_src>
import jax
import jax.numpy as jnp
from jax.experimental import pallas as pl
from jax.experimental.pallas import tpu as pltpu


def mlp_kernel(x_ref, w1_ref, b1_ref, w2_ref, b2_ref, o_ref):
    # net1: x @ W1 on the MXU (bf16 inputs, f32 accumulation).
    h = jnp.dot(x_ref[...], w1_ref[...], preferred_element_type=jnp.float32)
    # bias + ReLU in f32 on the VPU.
    h = jnp.maximum(h + b1_ref[...], 0.0)
    # Single intentional downcast before the second matmul.
    y = jnp.dot(h.astype(w2_ref.dtype), w2_ref[...],
                preferred_element_type=jnp.float32)
    o_ref[...] = (y + b2_ref[...]).astype(o_ref.dtype)


def toy_model_forward(x, w1, b1, w2, b2, *, block_rows=1024,
                      compute_dtype=jnp.bfloat16, out_dtype=None):
    """Fused forward of ToyModel.

    x:  (B, 16)
    w1: (16, 16)   stored (in, out)  -- i.e. torch weight transposed
    b1: (16,)
    w2: (16, 8)    stored (in, out)
    b2: (8,)
    """
    B, d_in = x.shape
    d_h = w1.shape[1]
    d_out = w2.shape[1]
    out_dtype = out_dtype if out_dtype is not None else x.dtype

    # Narrow the bandwidth-dominant operands; keep biases in f32.
    xc = x.astype(compute_dtype)
    w1c = w1.astype(compute_dtype)
    w2c = w2.astype(compute_dtype)
    b1_2d = b1.astype(jnp.float32).reshape(1, d_h)
    b2_2d = b2.astype(jnp.float32).reshape(1, d_out)

    # Batch tile: multiple of 8 sublanes, capped at block_rows.
    tb = min(block_rows, max(8, ((B + 7) // 8) * 8))
    padded_b = ((B + tb - 1) // tb) * tb
    if padded_b != B:
        xc = jnp.pad(xc, ((0, padded_b - B), (0, 0)))
    grid = (padded_b // tb,)

    flops = 2 * padded_b * (d_in * d_h + d_h * d_out)
    bytes_accessed = (
        padded_b * d_in * xc.dtype.itemsize
        + padded_b * d_out * jnp.dtype(out_dtype).itemsize
        + w1c.size * w1c.dtype.itemsize
        + w2c.size * w2c.dtype.itemsize
        + (b1_2d.size + b2_2d.size) * 4
    )

    out = pl.pallas_call(
        mlp_kernel,
        out_shape=jax.ShapeDtypeStruct((padded_b, d_out), out_dtype),
        grid=grid,
        in_specs=[
            pl.BlockSpec((tb, d_in), lambda i: (i, 0)),     # x: tiled over batch
            pl.BlockSpec((d_in, d_h), lambda i: (0, 0)),    # W1: VMEM-resident
            pl.BlockSpec((1, d_h), lambda i: (0, 0)),       # b1: VMEM-resident
            pl.BlockSpec((d_h, d_out), lambda i: (0, 0)),   # W2: VMEM-resident
            pl.BlockSpec((1, d_out), lambda i: (0, 0)),     # b2: VMEM-resident
        ],
        out_specs=pl.BlockSpec((tb, d_out), lambda i: (i, 0)),
        compiler_params=pltpu.CompilerParams(
            dimension_semantics=("parallel",)),
        cost_estimate=pl.CostEstimate(flops=flops, transcendentals=0,
                                      bytes_accessed=bytes_accessed),
    )(xc, w1c, b1_2d, w2c, b2_2d)
    return out[:B]


def reference_forward(x, w1, b1, w2, b2):
    h = jnp.maximum(x @ w1 + b1, 0.0)
    return h @ w2 + b2


if __name__ == "__main__":
    key = jax.random.PRNGKey(0)
    kx, k1, kb1, k2, kb2 = jax.random.split(key, 5)

    B = 8  # small batch for the check; kernel tiles 1024-row blocks at scale
    x = jax.random.normal(kx, (B, 16), dtype=jnp.float32)

    # Match torch.nn.Linear default init (uniform in +-1/sqrt(fan_in)).
    bound1 = 1.0 / jnp.sqrt(16.0)
    w1 = jax.random.uniform(k1, (16, 16), minval=-bound1, maxval=bound1,
                            dtype=jnp.float32)   # stored (in, out)
    b1 = jax.random.uniform(kb1, (16,), minval=-bound1, maxval=bound1,
                            dtype=jnp.float32)
    bound2 = 1.0 / jnp.sqrt(16.0)
    w2 = jax.random.uniform(k2, (16, 8), minval=-bound2, maxval=bound2,
                            dtype=jnp.float32)   # stored (in, out)
    b2 = jax.random.uniform(kb2, (8,), minval=-bound2, maxval=bound2,
                            dtype=jnp.float32)

    out = toy_model_forward(x, w1, b1, w2, b2)
    out = jax.block_until_ready(out)

    ref = reference_forward(x, w1, b1, w2, b2)
    assert out.shape == (B, 8), out.shape
    # bf16 matmul inputs (f32 accumulation) -> relaxed tolerance vs f32 ref.
    assert jnp.allclose(out, ref, atol=3e-2, rtol=3e-2), "mismatch vs reference"

    print("KERNEL_OK")
</pallas_src>

<mosaic_0001>
module attributes {stable_mosaic.version = 11 : i64} {
  func.func @mlp_kernel(%arg0: i32, %arg1: memref<8x16xbf16, #tpu.memory_space<vmem>>, %arg2: memref<16x16xbf16, #tpu.memory_space<vmem>>, %arg3: memref<1x16xf32, #tpu.memory_space<vmem>>, %arg4: memref<16x8xbf16, #tpu.memory_space<vmem>>, %arg5: memref<1x8xf32, #tpu.memory_space<vmem>>, %arg6: memref<8x8xf32, #tpu.memory_space<vmem>>) attributes {dimension_semantics = [#tpu.dimension_semantics<parallel>], iteration_bounds = array<i64: 1>, scalar_prefetch = 0 : i64, scratch_operands = 0 : i64, tpu.core_type = #tpu.core_type<tc>, window_params = [{transform_indices = @transform_0, window_bounds = array<i64: 8, 16>}, {pipeline_mode = #tpu.pipeline_mode<synchronous>, transform_indices = @transform_1, window_bounds = array<i64: 16, 16>}, {pipeline_mode = #tpu.pipeline_mode<synchronous>, transform_indices = @transform_2, window_bounds = array<i64: 1, 16>}, {pipeline_mode = #tpu.pipeline_mode<synchronous>, transform_indices = @transform_3, window_bounds = array<i64: 16, 8>}, {pipeline_mode = #tpu.pipeline_mode<synchronous>, transform_indices = @transform_4, window_bounds = array<i64: 1, 8>}, {transform_indices = @transform_5, window_bounds = array<i64: 8, 8>}]} {
    %c0 = arith.constant 0 : index
    %c0_0 = arith.constant 0 : index
    %0 = vector.load %arg1[%c0, %c0_0] : memref<8x16xbf16, #tpu.memory_space<vmem>>, vector<8x16xbf16>
    %c0_1 = arith.constant 0 : index
    %c0_2 = arith.constant 0 : index
    %1 = vector.load %arg2[%c0_1, %c0_2] : memref<16x16xbf16, #tpu.memory_space<vmem>>, vector<16x16xbf16>
    %cst = arith.constant dense<0.000000e+00> : vector<8x16xf32>
    %2 = tpu.matmul %0, %1, %cst {dimension_numbers = #tpu.dot_dimension_numbers<[1], [0], [0], [1], [0, 0, 1, 1], [], []>} : vector<8x16xbf16>, vector<16x16xbf16>, vector<8x16xf32> -> vector<8x16xf32>
    %c0_3 = arith.constant 0 : index
    %c0_4 = arith.constant 0 : index
    %3 = vector.load %arg3[%c0_3, %c0_4] : memref<1x16xf32, #tpu.memory_space<vmem>>, vector<1x16xf32>
    %4 = vector.broadcast %3 : vector<1x16xf32> to vector<8x16xf32>
    %5 = arith.addf %2, %4 : vector<8x16xf32>
    %cst_5 = arith.constant 0.000000e+00 : f32
    %6 = vector.broadcast %cst_5 : f32 to vector<8x16xf32>
    %7 = arith.maximumf %5, %6 : vector<8x16xf32>
    %8 = arith.truncf %7 : vector<8x16xf32> to vector<8x16xbf16>
    %c0_6 = arith.constant 0 : index
    %c0_7 = arith.constant 0 : index
    %9 = vector.load %arg4[%c0_6, %c0_7] : memref<16x8xbf16, #tpu.memory_space<vmem>>, vector<16x8xbf16>
    %cst_8 = arith.constant dense<0.000000e+00> : vector<8x8xf32>
    %10 = tpu.matmul %8, %9, %cst_8 {dimension_numbers = #tpu.dot_dimension_numbers<[1], [0], [0], [1], [0, 0, 1, 1], [], []>} : vector<8x16xbf16>, vector<16x8xbf16>, vector<8x8xf32> -> vector<8x8xf32>
    %c0_9 = arith.constant 0 : index
    %c0_10 = arith.constant 0 : index
    %11 = vector.load %arg5[%c0_9, %c0_10] : memref<1x8xf32, #tpu.memory_space<vmem>>, vector<1x8xf32>
    %12 = vector.broadcast %11 : vector<1x8xf32> to vector<8x8xf32>
    %13 = arith.addf %10, %12 : vector<8x8xf32>
    %c0_11 = arith.constant 0 : index
    %c0_12 = arith.constant 0 : index
    %14 = vector.load %arg6[%c0_11, %c0_12] : memref<8x8xf32, #tpu.memory_space<vmem>>, vector<8x8xf32>
    tpu.vector_store %arg6[%c0_11, %c0_12], %13 {strides = array<i32>} : memref<8x8xf32, #tpu.memory_space<vmem>>, vector<8x8xf32>,
    return
  }
  func.func @transform_0(%arg0: i32) -> (i32, i32) {
    %c0_i32 = arith.constant 0 : i32
    %c0_i32_0 = arith.constant 0 : i32
    return %arg0, %c0_i32 : i32, i32
  }
  func.func @transform_1(%arg0: i32) -> (i32, i32) {
    %c0_i32 = arith.constant 0 : i32
    %c0_i32_0 = arith.constant 0 : i32
    %c0_i32_1 = arith.constant 0 : i32
    return %c0_i32, %c0_i32_0 : i32, i32
  }
  func.func @transform_2(%arg0: i32) -> (i32, i32) {
    %c0_i32 = arith.constant 0 : i32
    %c0_i32_0 = arith.constant 0 : i32
    %c0_i32_1 = arith.constant 0 : i32
    return %c0_i32, %c0_i32_0 : i32, i32
  }
  func.func @transform_3(%arg0: i32) -> (i32, i32) {
    %c0_i32 = arith.constant 0 : i32
    %c0_i32_0 = arith.constant 0 : i32
    %c0_i32_1 = arith.constant 0 : i32
    return %c0_i32, %c0_i32_0 : i32, i32
  }
  func.func @transform_4(%arg0: i32) -> (i32, i32) {
    %c0_i32 = arith.constant 0 : i32
    %c0_i32_0 = arith.constant 0 : i32
    %c0_i32_1 = arith.constant 0 : i32
    return %c0_i32, %c0_i32_0 : i32, i32
  }
  func.func @transform_5(%arg0: i32) -> (i32, i32) {
    %c0_i32 = arith.constant 0 : i32
    %c0_i32_0 = arith.constant 0 : i32
    return %arg0, %c0_i32 : i32, i32
  }
}

</mosaic_0001>

<llo_original>
// kernel: tpu_custom_call.1
$region0: #{tpu_custom_call.1}
  #allocation0 [shape = 'u32[]', space=smem, size = 0x4, offset = 0x4, fixed_abs, tag = 'smem constant byte address 0x4 - core index']
  #allocation1 [shape = 'u32[144,128]{1,0:T(1,128)}', space=vmem, size = 0x12000, scoped, tag = 'internal scratch']
  %s0 = inlined_call_operand.vmem [shape: bf16[8,16], index: 0, kind: input, shape index: {}]
  %s1 = inlined_call_operand.vmem [shape: bf16[16,16], index: 1, kind: input, shape index: {}]
  %s2 = inlined_call_operand.vmem [shape: f32[1,16], index: 2, kind: input, shape index: {}]
  %s3 = inlined_call_operand.vmem [shape: bf16[16,8], index: 3, kind: input, shape index: {}]
  %s4 = inlined_call_operand.vmem [shape: f32[1,8], index: 4, kind: input, shape index: {}]
  %s5 = inlined_call_operand.hbm [shape: f32[8,8], index: 5, kind: output, shape index: {}]
  %s6 = sld [smem:[#allocation0]]
  $region30: #{tpu_custom_call.1} parent=0
    _
  %s8 = ssub.s32 1, %s6
  %s9 = scalar_select 0, %s8, %s6
  $region1: #{tpu_custom_call.1} parent=0
    #allocation2 [shape = 'u8[4096]{0}', space=vmem, size = 0x1000, scoped, tag = 'output window, operand 0, single buffered']
    #allocation3 [shape = 's32[1]{0}', space=sflag, size = 0x4, scoped, tag = 'scoped memory for tpu_custom_call.1']
    %10 = vsyncpa [#allocation3], 0
    // Predicated region
    $region2: #{tpu_custom_call.1} parent=1 // pred_check
      _
    $region3: #{tpu_custom_call.1} parent=1 // pred_check_branch
      %12 = sbr.rel (0) target = $region5
    $region4: #{tpu_custom_call.1} parent=1 // pred_region
      _
    $region5: #{tpu_custom_call.1} parent=1 // pred_fallthru
      _
    // Predicated region
    $region6: #{tpu_custom_call.1} parent=1 // pred_check
      _
    $region7: #{tpu_custom_call.1} parent=1 // pred_check_branch
      %14 = sbr.rel (0) target = $region9
    $region8: #{tpu_custom_call.1} parent=1 // pred_region
      _
    $region9: #{tpu_custom_call.1} parent=1 // pred_fallthru
      _
    // Predicated region
    $region10: #{tpu_custom_call.1} parent=1 // pred_check
      _
    $region11: #{tpu_custom_call.1} parent=1 // pred_check_branch
      %16 = sbr.rel (0) target = $region13
    $region12: #{tpu_custom_call.1} parent=1 // pred_region
      _
    $region13: #{tpu_custom_call.1} parent=1 // pred_fallthru
      _
    // Predicated region
    $region14: #{tpu_custom_call.1} parent=1 // pred_check
      _
    $region15: #{tpu_custom_call.1} parent=1 // pred_check_branch
      %18 = sbr.rel (0) target = $region17
    $region16: #{tpu_custom_call.1} parent=1 // pred_region
      _
    $region17: #{tpu_custom_call.1} parent=1 // pred_fallthru
      _
    // Predicated region
    $region18: #{tpu_custom_call.1} parent=1 // pred_check
      _
    $region19: #{tpu_custom_call.1} parent=1 // pred_check_branch
      %20 = sbr.rel (0) target = $region21
    $region20: #{tpu_custom_call.1} parent=1 // pred_region
      _
    $region21: #{tpu_custom_call.1} parent=1 // pred_fallthru
      _
    %v22 = vld [vmem:[%s0] sm:$0xf]
    %v23 = vld [vmem:[%s1] sm:$0xf]
    %v24 = vld [vmem:[%s1 + $0x4] sm:$0xf]
    %v25 = vld [vmem:[%s2] sm:$0x1]
    %v27 = vlaneseq
    %v28 = vshrl.u32 %v27, 7
    %v29 = vsub.s32 0, %v28
    %v30 = vrot.slane %v25, %v29
    %v34 = vunpack.c.l.b16 %v23
    %v35 = vunpack.c.l.b16 %v24
    %v36 = vpack.c.b16 %v35, %v34
    %vm38 = vcmask 130048
    %v40 = vsel %vm38, %v22, 0
    %42 = vmatprep.subr.bf16.mxu0 0
    %43 = vmatpush1.bf16.msra.mxu0 %v36
    %44 = vmatprep.subr.bf16.mxu0 0
    %45 = vmatpush1.bf16.msra.mxu0 0
    %46 = vmatprep.subr.bf16.mxu0 0
    %47 = vmatpush1.bf16.msra.mxu0 0
    %48 = vmatprep.subr.bf16.mxu0 0
    %49 = vmatpush1.bf16.msra.mxu0 0
    %50 = vmatprep.subr.bf16.mxu0 0
    %51 = vmatpush1.bf16.msra.mxu0 0
    %52 = vmatprep.subr.bf16.mxu0 0
    %53 = vmatpush1.bf16.msra.mxu0 0
    %54 = vmatprep.subr.bf16.mxu0 0
    %55 = vmatpush1.bf16.msra.mxu0 0
    %56 = vmatprep.subr.bf16.mxu0 0
    %57 = vmatpush1.bf16.msra.mxu0 0
    %58 = vmatprep.subr.bf16.mxu0 0
    %59 = vmatpush1.bf16.msra.mxu0 0
    %60 = vmatprep.subr.bf16.mxu0 0
    %61 = vmatpush1.bf16.msra.mxu0 0
    %62 = vmatprep.subr.bf16.mxu0 0
    %63 = vmatpush1.bf16.msra.mxu0 0
    %64 = vmatprep.subr.bf16.mxu0 0
    %65 = vmatpush1.bf16.msra.mxu0 0
    %66 = vmatprep.subr.bf16.mxu0 0
    %67 = vmatpush1.bf16.msra.mxu0 0
    %68 = vmatprep.subr.bf16.mxu0 0
    %69 = vmatpush1.bf16.msra.mxu0 0
    %70 = vmatprep.subr.bf16.mxu0 0
    %71 = vmatpush1.bf16.msra.mxu0 0
    %72 = vmatprep.subr.bf16.mxu0 0
    %73 = vmatpush1.bf16.msra.mxu0 0
    %74 = vmatprep.mubr.bf16.mxu0 0
    %75 = vmatmul.mubr.bf16.gmra.mrb[0].mxu0 %v40
    %v76 = vpop.f32.mrb[0].mxu0
    %v77 = vadd.f32 %v30, %v76
    %v78 = vpop.f32.mrb[0].mxu0
    %v79 = vpop.f32.mrb[0].mxu0
    %v80 = vpop.f32.mrb[0].mxu0
    %81 = vdwg.mxu0
    %v82 = vmax.f32 %v77, 0.0
    %v83 = vpack.c.bf16 %v82, %v82
    %v84 = vld [vmem:[%s3] sm:$0xf]
    %v85 = vld [vmem:[%s3 + $0x4] sm:$0xf]
    %v86 = vld [vmem:[%s4] sm:$0x1]
    %v88 = vlaneseq
    %v89 = vshrl.u32 %v88, 7
    %v90 = vsub.s32 0, %v89
    %v91 = vrot.slane %v86, %v90
    %v95 = vunpack.c.l.b16 %v84
    %v96 = vunpack.c.l.b16 %v85
    %v97 = vpack.c.b16 %v96, %v95
    %v100 = vsel %vm38, %v83, 0
    %102 = vmatprep.subr.bf16.mxu0 0
    %103 = vmatpush1.bf16.msra.mxu0 %v97
    %104 = vmatprep.subr.bf16.mxu0 0
    %105 = vmatpush1.bf16.msra.mxu0 0
    %106 = vmatprep.subr.bf16.mxu0 0
    %107 = vmatpush1.bf16.msra.mxu0 0
    %108 = vmatprep.subr.bf16.mxu0 0
    %109 = vmatpush1.bf16.msra.mxu0 0
    %110 = vmatprep.subr.bf16.mxu0 0
    %111 = vmatpush1.bf16.msra.mxu0 0
    %112 = vmatprep.subr.bf16.mxu0 0
    %113 = vmatpush1.bf16.msra.mxu0 0
    %114 = vmatprep.subr.bf16.mxu0 0
    %115 = vmatpush1.bf16.msra.mxu0 0
    %116 = vmatprep.subr.bf16.mxu0 0
    %117 = vmatpush1.bf16.msra.mxu0 0
    %118 = vmatprep.subr.bf16.mxu0 0
    %119 = vmatpush1.bf16.msra.mxu0 0
    %120 = vmatprep.subr.bf16.mxu0 0
    %121 = vmatpush1.bf16.msra.mxu0 0
    %122 = vmatprep.subr.bf16.mxu0 0
    %123 = vmatpush1.bf16.msra.mxu0 0
    %124 = vmatprep.subr.bf16.mxu0 0
    %125 = vmatpush1.bf16.msra.mxu0 0
    %126 = vmatprep.subr.bf16.mxu0 0
    %127 = vmatpush1.bf16.msra.mxu0 0
    %128 = vmatprep.subr.bf16.mxu0 0
    %129 = vmatpush1.bf16.msra.mxu0 0
    %130 = vmatprep.subr.bf16.mxu0 0
    %131 = vmatpush1.bf16.msra.mxu0 0
    %132 = vmatprep.subr.bf16.mxu0 0
    %133 = vmatpush1.bf16.msra.mxu0 0
    %134 = vmatprep.mubr.bf16.mxu0 0
    %135 = vmatmul.mubr.bf16.gmra.mrb[0].mxu0 %v100
    %v136 = vpop.f32.mrb[0].mxu0
    %v137 = vadd.f32 %v91, %v136
    %v138 = vpop.f32.mrb[0].mxu0
    %v139 = vpop.f32.mrb[0].mxu0
    %v140 = vpop.f32.mrb[0].mxu0
    %141 = vdwg.mxu0
    %vm142 = vcmask 64512
    %143 = vst.msk [vmem:[#allocation2] sm:$0xff] %vm142, %v137
    // Predicated region
    $region22: #{tpu_custom_call.1} parent=1 // pred_check
      _
    $region23: #{tpu_custom_call.1} parent=1 // pred_check_branch
      %145 = sbr.rel (0) target = $region25
    $region24: #{tpu_custom_call.1} parent=1 // pred_region
      %s147 = ssub.s32 128, 128
      %148 = vsyncadd [#allocation3], %s147
      %s150 = sshll.u32 [#allocation2], 4
      %s151 = int_to_ptr.vmem [resolvable:$true] %s150
      %153 = dma.vmem_to_hbm [thread:$0]  %s151, 128, %s5, [#allocation3]
    $region25: #{tpu_custom_call.1} parent=1 // pred_fallthru
      _
    // Predicated region
    $region26: #{tpu_custom_call.1} parent=1 // pred_check
      _
    $region27: #{tpu_custom_call.1} parent=1 // pred_check_branch
      %155 = sbr.rel (0) target = $region29
    $region28: #{tpu_custom_call.1} parent=1 // pred_region
      %156 = dma.done [#allocation3], 128
    $region29: #{tpu_custom_call.1} parent=1 // pred_fallthru
      _
    %157 = vsyncpa [#allocation3], 1

</llo_original>
